<compile_context>
chip_gen: v5e
topology: v5e:2x2
jax: 0.10.0
libtpu: 0.0.40
codegen_flags: <defaults>
</compile_context>

<pallas_src>
import functools

import jax
import jax.numpy as jnp
from jax.experimental import pallas as pl
from jax.experimental.pallas import tpu as pltpu


def _round_up(x: int, m: int) -> int:
    return pl.cdiv(x, m) * m


def mlp_kernel(x_ref, w1_ref, b1_ref, w2_ref, b2_ref, o_ref):
    # Hidden layer on the MXU: bf16 operands (cast of x is in-kernel / VPU), f32 acc.
    xb = x_ref[...].astype(w1_ref.dtype)
    h = jnp.dot(xb, w1_ref[...], preferred_element_type=jnp.float32)
    h = jnp.maximum(h + b1_ref[...], 0.0)          # f32 bias + ReLU (v5e-safe VPU path)
    # Output layer on the MXU: bf16 operands, f32 acc; store at true output width.
    y = jnp.dot(h.astype(w2_ref.dtype), w2_ref[...],
                preferred_element_type=jnp.float32)
    o_ref[...] = (y + b2_ref[...]).astype(o_ref.dtype)


def prepare_params(w_hidden, b_hidden, w_out, b_out, *, lane=128,
                   mm_dtype=jnp.bfloat16):
    """One-time parameter setup (hoisted out of the per-call forward path).

    Takes PyTorch nn.Linear layout: w_hidden (H, F), b_hidden (H,), w_out (O, H),
    b_out (O,). Returns transposed, 128-lane-padded (hidden dim only), bf16-cast
    weights plus f32 biases, ready to be passed to `net_forward` on every call.
    """
    H, F = w_hidden.shape
    O, H2 = w_out.shape
    assert H == H2 and b_hidden.shape == (H,) and b_out.shape == (O,)
    H_pad = _round_up(H, lane)
    w1p = jnp.zeros((F, H_pad), mm_dtype).at[:, :H].set(w_hidden.T.astype(mm_dtype))
    b1p = jnp.zeros((1, H_pad), jnp.float32).at[0, :H].set(b_hidden.astype(jnp.float32))
    w2p = jnp.zeros((H_pad, O), mm_dtype).at[:H, :].set(w_out.T.astype(mm_dtype))
    b2p = b_out.astype(jnp.float32).reshape(1, O)
    return w1p, b1p, w2p, b2p


@functools.partial(jax.jit, static_argnames=("batch_tile", "core_parallel"))
def net_forward(x, params, *, batch_tile=4096, core_parallel=False):
    """x: (B, F) float; params from prepare_params. Returns (B, O) float32."""
    w1p, b1p, w2p, b2p = params
    B, F = x.shape
    F_w, H_pad = w1p.shape
    H_pad2, O = w2p.shape
    assert F == F_w and H_pad == H_pad2 and b1p.shape == (1, H_pad) and b2p.shape == (1, O)

    # Batch tile: multiple of 8 (sublane constraint), capped by the (rounded) batch.
    TB = max(8, min(_round_up(batch_tile, 8), _round_up(B, 8)))
    num_tiles = pl.cdiv(B, TB)   # ragged last tile: OOB reads unspecified, OOB writes dropped

    # Deeper buffering on the one streaming input (only useful with a long grid).
    x_spec_kwargs = {}
    if num_tiles >= 3:
        x_spec_kwargs = dict(pipeline_mode=pl.Buffered(3))

    # Advisory cost estimate so XLA can schedule producers/consumers around the kernel.
    flops = 2 * B * (F * H_pad + H_pad * O)
    bytes_accessed = (B * F * x.dtype.itemsize                 # x read (no padded copy)
                      + w1p.size * w1p.dtype.itemsize
                      + b1p.size * 4
                      + w2p.size * w2p.dtype.itemsize
                      + b2p.size * 4
                      + B * O * 4)                             # output write (true width)

    # On v7x set core_parallel=True so the batch axis is split across both TensorCores;
    # plain "parallel" is kept as the safe default for single-core v5e/v6e.
    sem = pltpu.CORE_PARALLEL if core_parallel else pltpu.PARALLEL

    return pl.pallas_call(
        mlp_kernel,
        out_shape=jax.ShapeDtypeStruct((B, O), jnp.float32),
        grid=(num_tiles,),
        in_specs=[
            # Activations: tiled over batch, feature dim unpadded (== full array dim).
            pl.BlockSpec((TB, F), lambda i: (i, 0), **x_spec_kwargs),
            # Weights / biases: constant index_maps -> resident in VMEM across the grid.
            pl.BlockSpec((F, H_pad), lambda i: (0, 0)),
            pl.BlockSpec((1, H_pad), lambda i: (0, 0)),
            pl.BlockSpec((H_pad, O), lambda i: (0, 0)),
            pl.BlockSpec((1, O), lambda i: (0, 0)),
        ],
        # Output at its true width: no 128-lane padding, no post-kernel slice pass.
        out_specs=pl.BlockSpec((TB, O), lambda i: (i, 0)),
        compiler_params=pltpu.CompilerParams(dimension_semantics=(sem,)),
        cost_estimate=pl.CostEstimate(flops=flops, transcendentals=0,
                                      bytes_accessed=bytes_accessed),
    )(x, w1p, b1p, w2p, b2p)


def _reference(x, w_hidden, b_hidden, w_out, b_out):
    # Same numerics as the kernel: bf16 MXU operands, f32 accumulation/epilogue.
    h = jnp.dot(x.astype(jnp.bfloat16), w_hidden.T.astype(jnp.bfloat16),
                preferred_element_type=jnp.float32)
    h = jnp.maximum(h + b_hidden[None, :].astype(jnp.float32), 0.0)
    y = jnp.dot(h.astype(jnp.bfloat16), w_out.T.astype(jnp.bfloat16),
                preferred_element_type=jnp.float32)
    return y + b_out[None, :].astype(jnp.float32)


if __name__ == "__main__":
    # Shapes consistent with the module: n_features=16, n_hidden=32, n_output=8, batch=8.
    B, F, H, O = 8, 16, 32, 8

    key = jax.random.PRNGKey(0)
    kx, kw1, kb1, kw2, kb2 = jax.random.split(key, 5)

    x = jax.random.normal(kx, (B, F), dtype=jnp.float32)
    # PyTorch nn.Linear layout: weight (out_features, in_features), bias (out_features,).
    w_hidden = jax.random.normal(kw1, (H, F), dtype=jnp.float32) * 0.1
    b_hidden = jax.random.normal(kb1, (H,), dtype=jnp.float32) * 0.1
    w_out = jax.random.normal(kw2, (O, H), dtype=jnp.float32) * 0.1
    b_out = jax.random.normal(kb2, (O,), dtype=jnp.float32) * 0.1

    # One-time parameter prep (pad/cast hoisted out of every forward call).
    params = prepare_params(w_hidden, b_hidden, w_out, b_out)

    out = jax.block_until_ready(net_forward(x, params))
    ref = _reference(x, w_hidden, b_hidden, w_out, b_out)
    assert out.shape == (B, O)
    assert jnp.allclose(out, ref, atol=2e-2, rtol=2e-2), \
        f"max err {jnp.max(jnp.abs(out - ref))}"

    # Exercise the multi-tile path with a ragged last batch tile (grid=3, 300 % 128 != 0)
    # and the Buffered(3) streaming-input spec.
    B2 = 300
    x2 = jax.random.normal(jax.random.PRNGKey(1), (B2, F), dtype=jnp.float32)
    out2 = jax.block_until_ready(net_forward(x2, params, batch_tile=128))
    ref2 = _reference(x2, w_hidden, b_hidden, w_out, b_out)
    assert out2.shape == (B2, O)
    assert jnp.allclose(out2, ref2, atol=2e-2, rtol=2e-2), \
        f"max err {jnp.max(jnp.abs(out2 - ref2))}"

    print("KERNEL_OK")
</pallas_src>

<mosaic_0001>
module attributes {stable_mosaic.version = 11 : i64} {
  func.func @mlp_kernel(%arg0: i32, %arg1: memref<8x16xf32, #tpu.memory_space<vmem>>, %arg2: memref<16x128xbf16, #tpu.memory_space<vmem>>, %arg3: memref<1x128xf32, #tpu.memory_space<vmem>>, %arg4: memref<128x8xbf16, #tpu.memory_space<vmem>>, %arg5: memref<1x8xf32, #tpu.memory_space<vmem>>, %arg6: memref<8x8xf32, #tpu.memory_space<vmem>>) attributes {dimension_semantics = [#tpu.dimension_semantics<parallel>], iteration_bounds = array<i64: 1>, scalar_prefetch = 0 : i64, scratch_operands = 0 : i64, tpu.core_type = #tpu.core_type<tc>, window_params = [{transform_indices = @transform_0, window_bounds = array<i64: 8, 16>}, {pipeline_mode = #tpu.pipeline_mode<synchronous>, transform_indices = @transform_1, window_bounds = array<i64: 16, 128>}, {pipeline_mode = #tpu.pipeline_mode<synchronous>, transform_indices = @transform_2, window_bounds = array<i64: 1, 128>}, {pipeline_mode = #tpu.pipeline_mode<synchronous>, transform_indices = @transform_3, window_bounds = array<i64: 128, 8>}, {pipeline_mode = #tpu.pipeline_mode<synchronous>, transform_indices = @transform_4, window_bounds = array<i64: 1, 8>}, {transform_indices = @transform_5, window_bounds = array<i64: 8, 8>}]} {
    %c0 = arith.constant 0 : index
    %c0_0 = arith.constant 0 : index
    %0 = vector.load %arg1[%c0, %c0_0] : memref<8x16xf32, #tpu.memory_space<vmem>>, vector<8x16xf32>
    %1 = arith.truncf %0 : vector<8x16xf32> to vector<8x16xbf16>
    %c0_1 = arith.constant 0 : index
    %c0_2 = arith.constant 0 : index
    %2 = vector.load %arg2[%c0_1, %c0_2] : memref<16x128xbf16, #tpu.memory_space<vmem>>, vector<16x128xbf16>
    %cst = arith.constant dense<0.000000e+00> : vector<8x128xf32>
    %3 = tpu.matmul %1, %2, %cst {dimension_numbers = #tpu.dot_dimension_numbers<[1], [0], [0], [1], [0, 0, 1, 1], [], []>} : vector<8x16xbf16>, vector<16x128xbf16>, vector<8x128xf32> -> vector<8x128xf32>
    %c0_3 = arith.constant 0 : index
    %c0_4 = arith.constant 0 : index
    %4 = vector.load %arg3[%c0_3, %c0_4] : memref<1x128xf32, #tpu.memory_space<vmem>>, vector<1x128xf32>
    %5 = vector.broadcast %4 : vector<1x128xf32> to vector<8x128xf32>
    %6 = arith.addf %3, %5 : vector<8x128xf32>
    %cst_5 = arith.constant 0.000000e+00 : f32
    %7 = vector.broadcast %cst_5 : f32 to vector<8x128xf32>
    %8 = arith.maximumf %6, %7 : vector<8x128xf32>
    %9 = arith.truncf %8 : vector<8x128xf32> to vector<8x128xbf16>
    %c0_6 = arith.constant 0 : index
    %c0_7 = arith.constant 0 : index
    %10 = vector.load %arg4[%c0_6, %c0_7] : memref<128x8xbf16, #tpu.memory_space<vmem>>, vector<128x8xbf16>
    %cst_8 = arith.constant dense<0.000000e+00> : vector<8x8xf32>
    %11 = tpu.matmul %9, %10, %cst_8 {dimension_numbers = #tpu.dot_dimension_numbers<[1], [0], [0], [1], [0, 0, 1, 1], [], []>} : vector<8x128xbf16>, vector<128x8xbf16>, vector<8x8xf32> -> vector<8x8xf32>
    %c0_9 = arith.constant 0 : index
    %c0_10 = arith.constant 0 : index
    %12 = vector.load %arg5[%c0_9, %c0_10] : memref<1x8xf32, #tpu.memory_space<vmem>>, vector<1x8xf32>
    %13 = vector.broadcast %12 : vector<1x8xf32> to vector<8x8xf32>
    %14 = arith.addf %11, %13 : vector<8x8xf32>
    %c0_11 = arith.constant 0 : index
    %c0_12 = arith.constant 0 : index
    %15 = vector.load %arg6[%c0_11, %c0_12] : memref<8x8xf32, #tpu.memory_space<vmem>>, vector<8x8xf32>
    tpu.vector_store %arg6[%c0_11, %c0_12], %14 {strides = array<i32>} : memref<8x8xf32, #tpu.memory_space<vmem>>, vector<8x8xf32>,
    return
  }
  func.func @transform_0(%arg0: i32) -> (i32, i32) {
    %c0_i32 = arith.constant 0 : i32
    %c0_i32_0 = arith.constant 0 : i32
    return %arg0, %c0_i32 : i32, i32
  }
  func.func @transform_1(%arg0: i32) -> (i32, i32) {
    %c0_i32 = arith.constant 0 : i32
    %c0_i32_0 = arith.constant 0 : i32
    %c0_i32_1 = arith.constant 0 : i32
    return %c0_i32, %c0_i32_0 : i32, i32
  }
  func.func @transform_2(%arg0: i32) -> (i32, i32) {
    %c0_i32 = arith.constant 0 : i32
    %c0_i32_0 = arith.constant 0 : i32
    %c0_i32_1 = arith.constant 0 : i32
    return %c0_i32, %c0_i32_0 : i32, i32
  }
  func.func @transform_3(%arg0: i32) -> (i32, i32) {
    %c0_i32 = arith.constant 0 : i32
    %c0_i32_0 = arith.constant 0 : i32
    %c0_i32_1 = arith.constant 0 : i32
    return %c0_i32, %c0_i32_0 : i32, i32
  }
  func.func @transform_4(%arg0: i32) -> (i32, i32) {
    %c0_i32 = arith.constant 0 : i32
    %c0_i32_0 = arith.constant 0 : i32
    %c0_i32_1 = arith.constant 0 : i32
    return %c0_i32, %c0_i32_0 : i32, i32
  }
  func.func @transform_5(%arg0: i32) -> (i32, i32) {
    %c0_i32 = arith.constant 0 : i32
    %c0_i32_0 = arith.constant 0 : i32
    return %arg0, %c0_i32 : i32, i32
  }
}

</mosaic_0001>

<llo_original>
// kernel: net_forward.1
$region0: #{net_forward.1}
  #allocation0 [shape = 'u32[]', space=smem, size = 0x4, offset = 0x4, fixed_abs, tag = 'smem constant byte address 0x4 - core index']
  #allocation1 [shape = 'u32[72,128]{1,0:T(1,128)}', space=vmem, size = 0x9000, scoped, tag = 'internal scratch']
  %s0 = inlined_call_operand.vmem [shape: f32[8,16], index: 0, kind: input, shape index: {}]
  %s1 = inlined_call_operand.vmem [shape: bf16[16,128], index: 1, kind: input, shape index: {}]
  %s2 = inlined_call_operand.vmem [shape: f32[1,128], index: 2, kind: input, shape index: {}]
  %s3 = inlined_call_operand.vmem [shape: bf16[128,8], index: 3, kind: input, shape index: {}]
  %s4 = inlined_call_operand.vmem [shape: f32[1,8], index: 4, kind: input, shape index: {}]
  %s5 = inlined_call_operand.hbm [shape: f32[8,8], index: 5, kind: output, shape index: {}]
  %s6 = sld [smem:[#allocation0]]
  $region30: #{net_forward.1} parent=0
    _
  %s8 = ssub.s32 1, %s6
  %s9 = scalar_select 0, %s8, %s6
  $region1: #{net_forward.1} parent=0
    #allocation2 [shape = 'u8[4096]{0}', space=vmem, size = 0x1000, scoped, tag = 'output window, operand 0, single buffered']
    #allocation3 [shape = 's32[1]{0}', space=sflag, size = 0x4, scoped, tag = 'scoped memory for net_forward.1']
    %10 = vsyncpa [#allocation3], 0
    // Predicated region
    $region2: #{net_forward.1} parent=1 // pred_check
      _
    $region3: #{net_forward.1} parent=1 // pred_check_branch
      %12 = sbr.rel (0) target = $region5
    $region4: #{net_forward.1} parent=1 // pred_region
      _
    $region5: #{net_forward.1} parent=1 // pred_fallthru
      _
    // Predicated region
    $region6: #{net_forward.1} parent=1 // pred_check
      _
    $region7: #{net_forward.1} parent=1 // pred_check_branch
      %14 = sbr.rel (0) target = $region9
    $region8: #{net_forward.1} parent=1 // pred_region
      _
    $region9: #{net_forward.1} parent=1 // pred_fallthru
      _
    // Predicated region
    $region10: #{net_forward.1} parent=1 // pred_check
      _
    $region11: #{net_forward.1} parent=1 // pred_check_branch
      %16 = sbr.rel (0) target = $region13
    $region12: #{net_forward.1} parent=1 // pred_region
      _
    $region13: #{net_forward.1} parent=1 // pred_fallthru
      _
    // Predicated region
    $region14: #{net_forward.1} parent=1 // pred_check
      _
    $region15: #{net_forward.1} parent=1 // pred_check_branch
      %18 = sbr.rel (0) target = $region17
    $region16: #{net_forward.1} parent=1 // pred_region
      _
    $region17: #{net_forward.1} parent=1 // pred_fallthru
      _
    // Predicated region
    $region18: #{net_forward.1} parent=1 // pred_check
      _
    $region19: #{net_forward.1} parent=1 // pred_check_branch
      %20 = sbr.rel (0) target = $region21
    $region20: #{net_forward.1} parent=1 // pred_region
      _
    $region21: #{net_forward.1} parent=1 // pred_fallthru
      _
    %v22 = vld [vmem:[%s0] sm:$0xff]
    %v23 = vpack.c.bf16 %v22, %v22
    %v24 = vld [vmem:[%s1] sm:$0xf]
    %v25 = vld [vmem:[%s1 + $0x4] sm:$0xf]
    %v26 = vld [vmem:[%s2] sm:$0x1]
    %v28 = vperm.slane %v26, 0
    %v32 = vunpack.c.l.b16 %v24
    %v33 = vunpack.c.l.b16 %v25
    %v34 = vpack.c.b16 %v33, %v32
    %vm36 = vcmask 130048
    %v38 = vsel %vm36, %v23, 0
    %40 = vmatpush.bf16.msra.mxu0 0
    %41 = vmatpush.bf16.msra.mxu0 0
    %42 = vmatpush.bf16.msra.mxu0 0
    %43 = vmatpush.bf16.msra.mxu0 0
    %44 = vmatpush.bf16.msra.mxu0 0
    %45 = vmatpush.bf16.msra.mxu0 0
    %46 = vmatpush.bf16.msra.mxu0 0
    %47 = vmatpush.bf16.msra.mxu0 %v34
    %48 = vmatmul.bf16.gmra.mxu0 %v38
    %v49 = vpop.f32.mrf.mxu0
    %v50 = vadd.f32 %v28, %v49
    %v51 = vpop.f32.mrf.mxu0
    %52 = vdwg.mxu0
    %v53 = vmax.f32 %v50, 0.0
    %v54 = vpack.c.bf16 %v53, %v53
    %v55 = vld [vmem:[%s3] sm:$0xf]
    %v56 = vld [vmem:[%s3 + $0x4] sm:$0xf]
    %v57 = vld [vmem:[%s3 + $0x8] sm:$0xf]
    %v58 = vld [vmem:[%s3 + $0xc] sm:$0xf]
    %v59 = vld [vmem:[%s3 + $0x10] sm:$0xf]
    %v60 = vld [vmem:[%s3 + $0x14] sm:$0xf]
    %v61 = vld [vmem:[%s3 + $0x18] sm:$0xf]
    %v62 = vld [vmem:[%s3 + $0x1c] sm:$0xf]
    %v63 = vld [vmem:[%s3 + $0x20] sm:$0xf]
    %v64 = vld [vmem:[%s3 + $0x24] sm:$0xf]
    %v65 = vld [vmem:[%s3 + $0x28] sm:$0xf]
    %v66 = vld [vmem:[%s3 + $0x2c] sm:$0xf]
    %v67 = vld [vmem:[%s3 + $0x30] sm:$0xf]
    %v68 = vld [vmem:[%s3 + $0x34] sm:$0xf]
    %v69 = vld [vmem:[%s3 + $0x38] sm:$0xf]
    %v70 = vld [vmem:[%s3 + $0x3c] sm:$0xf]
    %v71 = vld [vmem:[%s4] sm:$0x1]
    %v73 = vperm.slane %v71, 0
    %v91 = vunpack.c.l.b16 %v55
    %v92 = vunpack.c.l.b16 %v56
    %v93 = vunpack.c.l.b16 %v57
    %v94 = vunpack.c.l.b16 %v58
    %v95 = vunpack.c.l.b16 %v59
    %v96 = vunpack.c.l.b16 %v60
    %v97 = vunpack.c.l.b16 %v61
    %v98 = vunpack.c.l.b16 %v62
    %v99 = vunpack.c.l.b16 %v63
    %v100 = vunpack.c.l.b16 %v64
    %v101 = vunpack.c.l.b16 %v65
    %v102 = vunpack.c.l.b16 %v66
    %v103 = vunpack.c.l.b16 %v67
    %v104 = vunpack.c.l.b16 %v68
    %v105 = vunpack.c.l.b16 %v69
    %v106 = vunpack.c.l.b16 %v70
    %v107 = vpack.c.b16 %v92, %v91
    %v108 = vpack.c.b16 %v94, %v93
    %v109 = vpack.c.b16 %v96, %v95
    %v110 = vpack.c.b16 %v98, %v97
    %v111 = vpack.c.b16 %v100, %v99
    %v112 = vpack.c.b16 %v102, %v101
    %v113 = vpack.c.b16 %v104, %v103
    %v114 = vpack.c.b16 %v106, %v105
    %123 = vmatpush.bf16.msra.mxu0 %v114
    %124 = vmatpush.bf16.msra.mxu0 %v113
    %125 = vmatpush.bf16.msra.mxu0 %v112
    %126 = vmatpush.bf16.msra.mxu0 %v111
    %127 = vmatpush.bf16.msra.mxu0 %v110
    %128 = vmatpush.bf16.msra.mxu0 %v109
    %129 = vmatpush.bf16.msra.mxu0 %v108
    %130 = vmatpush.bf16.msra.mxu0 %v107
    %131 = vmatmul.bf16.gmra.mxu0 %v54
    %v132 = vpop.f32.mrf.mxu0
    %v133 = vadd.f32 %v73, %v132
    %v134 = vpop.f32.mrf.mxu0
    %135 = vdwg.mxu0
    %vm136 = vcmask 64512
    %137 = vst.msk [vmem:[#allocation2] sm:$0xff] %vm136, %v133
    // Predicated region
    $region22: #{net_forward.1} parent=1 // pred_check
      _
    $region23: #{net_forward.1} parent=1 // pred_check_branch
      %139 = sbr.rel (0) target = $region25
    $region24: #{net_forward.1} parent=1 // pred_region
      %141 = vsyncadd [#allocation3], 0
      %s143 = sshll.u32 [#allocation2], 4
      %s144 = int_to_ptr.vmem [resolvable:$true] %s143
      %s145 = sshll.u32 %s5, 4
      %s146 = int_to_ptr.hbm [resolvable:$true] %s145
      %148 = dma.vmem_to_hbm [thread:$0]  %s144, 128, %s146, [#allocation3]
    $region25: #{net_forward.1} parent=1 // pred_fallthru
      _
    // Predicated region
    $region26: #{net_forward.1} parent=1 // pred_check
      _
    $region27: #{net_forward.1} parent=1 // pred_check_branch
      %150 = sbr.rel (0) target = $region29
    $region28: #{net_forward.1} parent=1 // pred_region
      %152 = dma.done [#allocation3], 128
    $region29: #{net_forward.1} parent=1 // pred_fallthru
      _
    %153 = vsyncpa [#allocation3], 1

</llo_original>
